<compile_context>
chip_gen: v5e
topology: v5e:2x2
jax: 0.10.0
libtpu: 0.0.40
codegen_flags: <defaults>
</compile_context>

<pallas_src>
import jax
import jax.numpy as jnp
from jax import lax
from jax.experimental import pallas as pl
from jax.experimental.pallas import tpu as pltpu

# ---- model / problem sizes (consistent with the module) ----
E     = 32   # embedding_dim
H     = 2    # num_heads
DH    = 16   # attention_head_dim
S_DEC = 8    # decoder sequence length
S_ENC = 8    # encoder sequence length (must equal S_DEC for the lane-packed input)
EPS   = 1e-6

FUSED_W = 2 * H * E        # 128: per-MHA fused projection width (H A-blocks + H VO-blocks)
W_COLS  = 2 * FUSED_W      # 256: block-diagonal fused weight width (MHA1 block | MHA2 kv-side block)

# ---- row layout of the packed bias / LayerNorm block inside the parameter slab (NB_ROWS, E) ----
R_VB1 = 0                          # rows [0, H):      MHA1 folded key-side score bias (Wk_h bq_h / sqrt(d))
R_BO1 = H                          # row  H:           MHA1 folded output bias (bo + sum_h bv_h Wo_h)
R_VB2 = H + 1                      # rows [H+1, 2H+1): MHA2 folded key-side score bias
R_BO2 = 2 * H + 1                  # row  2H+1:        MHA2 folded output bias
R_BAF = 2 * H + 2                  # row  2H+2:        folded ff bias (b_out2 @ Wf + bf)
R_G1, R_B1 = 2 * H + 3, 2 * H + 4  # LayerNorm1 gamma / beta
R_G2, R_B2 = 2 * H + 5, 2 * H + 6  # LayerNorm2 gamma / beta
R_G3, R_B3 = 2 * H + 7, 2 * H + 8  # LayerNorm3 gamma / beta
NB_ROWS = 2 * H + 9

# ---- parameter slab layout (SLAB_ROWS, W_COLS) ----
#   rows [0, 2E)        : W_big  (2E, 256)  block-diag [W1 | 0 ; 0 | W2_kv]
#   rows [2E, 3E)       : W2_A   in lanes [0, H*E)          (cross-attn query-side [A2_0 | A2_1])
#   rows [3E, 3E+NB_ROWS): bias / LayerNorm pack in lanes [0, E)
SLAB_ROWS = 3 * E + NB_ROWS        # 109


# ------------------------- in-kernel math (traced once) -------------------------
def _softmax_rows(s):
    m = jnp.max(s, axis=-1, keepdims=True)
    p = jnp.exp(s - m)
    return p * pl.reciprocal(jnp.sum(p, axis=-1, keepdims=True), approx=True)   # EUP reciprocal


def _layer_norm(t, gamma, beta):
    """Reference LayerNormalization: scalar mean / unbiased std over the WHOLE tensor, then affine.
    eps is folded into the variance so the inverse std is a single EUP rsqrt (<=1e-6 rel. vs 1/(std+eps))."""
    n = t.shape[0] * t.shape[1]
    mean = jnp.sum(jnp.sum(t, axis=-1, keepdims=True), axis=0, keepdims=True) * (1.0 / n)
    d = t - mean
    var = jnp.sum(jnp.sum(d * d, axis=-1, keepdims=True), axis=0, keepdims=True) * (1.0 / (n - 1))
    return gamma * (d * lax.rsqrt(var + EPS * EPS)) + beta


def _attn_probs(qa, x_kv, vb, pb_ref):
    """All-heads-fused attention probabilities.

    qa    : (S_q, H*E)  = [x_q A_0 | ... | x_q A_{H-1}]   (A_h = Wq_h Wk_h^T / sqrt(d), pre-folded)
    x_kv  : (S_kv, E)
    vb    : (H, E)      folded key-side score-bias rows (Wk_h bq_h / sqrt(d))
    pb_ref: (S_q, H*S_kv) VMEM scratch used to assemble the lane-blocked probability matrix.
    Returns P_blk (S_q, H*S_kv) = [softmax(s_0) | ... | softmax(s_{H-1})].
    """
    s_q, s_kv = qa.shape[0], x_kv.shape[0]
    # ONE MXU pass for all heads' raw scores AND the key-side bias rows:
    #   [x_q A_0 ; x_q A_1 ; vb] (H*S_q+H, E) @ x_kv^T  ->  (H*S_q+H, S_kv)
    lhs = jnp.concatenate([qa[:, h * E:(h + 1) * E] for h in range(H)] + [vb], axis=0)
    big = lax.dot_general(lhs, x_kv, (((1,), (1,)), ((), ())),
                          preferred_element_type=jnp.float32)
    bias = jnp.concatenate(
        [jnp.broadcast_to(big[H * s_q + h:H * s_q + h + 1, :], (s_q, s_kv)) for h in range(H)],
        axis=0)                                                  # (H*S_q, S_kv) sublane-broadcast bias
    p = _softmax_rows(big[:H * s_q, :] + bias)                   # ONE softmax pass over all heads
    # Lane-blocked layout [p_0 | p_1] so the PV (+ folded ff) contraction is ONE matmul.
    # Assembled via masked stores into a tiny VMEM scratch (robust, layout-only data movement).
    for h in range(H):
        pb_ref[:, h * s_kv:(h + 1) * s_kv] = p[h * s_q:(h + 1) * s_q, :]
    return pb_ref[...]


# ----------------------------------- kernel -----------------------------------
def _decoder_kernel(xe_ref, p_ref, out_ref, pb1_ref, pb2_ref):
    xe = xe_ref[...]                              # (S, 2E) = [x | enc] packed on lanes
    x, enc = xe[:, :E], xe[:, E:]

    w_big = p_ref[0:2 * E, :]                     # (2E, 256) block-diag fused projection weight
    w2a   = p_ref[2 * E:3 * E, 0:H * E]           # (E, 2E)   cross-attn query-side [A2_0 | A2_1]
    B     = p_ref[3 * E:3 * E + NB_ROWS, 0:E]     # (NB_ROWS, E) folded biases + LayerNorm affines

    # ---- fused projection pass: ONE (S,2E)@(2E,256) MXU push yields
    #   p1  = x   @ [A1_0 | A1_1 | Wvo1_0 | Wvo1_1]                       (self-attn, everything)
    #   pk2 = enc @ [Wvo2_0 | Wvo2_0.Wf | Wvo2_1 | Wvo2_1.Wf]             (cross-attn kv-side, ff folded)
    proj = jnp.dot(xe, w_big, preferred_element_type=jnp.float32)         # (S, 256)
    p1, pk2 = proj[:, :FUSED_W], proj[:, FUSED_W:]

    # ---- masked self-attention (no mask applied; see TODO at top) ----
    P1  = _attn_probs(p1[:, :H * E], x, B[R_VB1:R_VB1 + H, :], pb1_ref)   # (S, H*S)
    vo1 = jnp.concatenate([p1[:, (H + h) * E:(H + h + 1) * E] for h in range(H)], axis=0)  # (H*S, E)
    attn1 = jnp.dot(P1, vo1, preferred_element_type=jnp.float32) + B[R_BO1:R_BO1 + 1, :]
    x1 = _layer_norm(x + attn1, B[R_G1:R_G1 + 1, :], B[R_B1:R_B1 + 1, :])

    # ---- encoder-decoder cross attention, ff Linear folded into the value/output path ----
    pq2 = jnp.dot(x1, w2a, preferred_element_type=jnp.float32)            # (S, H*E) = [x1 A2_0 | x1 A2_1]
    P2  = _attn_probs(pq2, enc, B[R_VB2:R_VB2 + H, :], pb2_ref)           # (S, H*S)
    vo2 = jnp.concatenate([pk2[:, 2 * h * E:2 * (h + 1) * E] for h in range(H)], axis=0)   # (H*S, 2E)
    fused2 = jnp.dot(P2, vo2, preferred_element_type=jnp.float32)         # (S, 2E) = [attn2 | ff(attn2)] cores
    attn2 = fused2[:, :E] + B[R_BO2:R_BO2 + 1, :]
    after = fused2[:, E:] + B[R_BAF:R_BAF + 1, :]

    x2 = _layer_norm(x1 + attn2, B[R_G2:R_G2 + 1, :], B[R_B2:R_B2 + 1, :])
    out_ref[...] = _layer_norm(x2 + after,
                               B[R_G3:R_G3 + 1, :], B[R_B3:R_B3 + 1, :]).astype(out_ref.dtype)


@jax.jit
def decoder_layer(x, enc, slab):
    """Grid-less single invocation, all operands resident in VMEM.
    2 input DMAs (lane-packed [x | enc] + one parameter slab) + 1 output DMA."""
    xe = jnp.concatenate([x, enc], axis=1)                                # (S, 2E), requires S_DEC == S_ENC
    vmem = pl.BlockSpec(memory_space=pltpu.MemorySpace.VMEM)
    return pl.pallas_call(
        _decoder_kernel,
        out_shape=jax.ShapeDtypeStruct((x.shape[0], E), jnp.float32),
        in_specs=[vmem, vmem],
        out_specs=vmem,
        scratch_shapes=[pltpu.VMEM((S_DEC, H * S_DEC), jnp.float32),      # P_blk scratch, self-attn
                        pltpu.VMEM((S_DEC, H * S_ENC), jnp.float32)],     # P_blk scratch, cross-attn
    )(xe, slab)


# --------------------------- parameters & host-side fold ---------------------------
def make_params(key):
    """Original (unfused) parameterization, mirroring the torch module."""
    keys = iter(jax.random.split(key, 32))

    def rnd(shape, scale=0.1):
        return jax.random.normal(next(keys), shape, jnp.float32) * scale

    def mha_params():
        return [rnd((E, H * DH)), rnd((1, H * DH)),   # W_q (all heads), b_q
                rnd((E, H * DH)), rnd((1, H * DH)),   # W_k, b_k
                rnd((E, H * DH)), rnd((1, H * DH)),   # W_v, b_v
                rnd((H * DH, E)), rnd((1, E))]        # output Linear W, b

    params = mha_params() + mha_params()              # masked-self-attn, enc-dec-attn
    params += [rnd((E, E)), rnd((1, E))]              # ff Linear
    for _ in range(3):                                # layer_norm1/2/3: gamma=1, beta=0
        params += [jnp.ones((1, E), jnp.float32), jnp.zeros((1, E), jnp.float32)]
    return tuple(params)


def fold_params(params):
    """One-time host-side exact algebraic folding + packing into ONE parameter slab:
         W_big (2E, 256): block-diag [ [A1_0|A1_1|Wvo1_0|Wvo1_1]          , 0
                                       0, [Wvo2_0|Wvo2_0.Wf|Wvo2_1|Wvo2_1.Wf] ]
         W2_A  (E, 2E)  : [A2_0 | A2_1]           (A_h = Wq_h Wk_h^T / sqrt(d), Wvo_h = Wv_h Wo_h)
         bias pack      : key-side score biases, folded output biases, folded ff bias, LN affines."""
    (wq1, bq1, wk1, bk1, wv1, bv1, wo1, bo1,
     wq2, bq2, wk2, bk2, wv2, bv2, wo2, bo2,
     wf, bf, g1, be1, g2, be2, g3, be3) = params
    scale = 1.0 / (DH ** 0.5)

    with jax.default_matmul_precision("highest"):
        def fold_mha(wq, bq, wk, bk, wv, bv, wo, bo):
            a_blk, vo_blk, vbias = [], [], []
            b_out = bo[0]
            for h in range(H):
                sl = slice(h * DH, (h + 1) * DH)
                wq_h, wk_h, wv_h, wo_h = wq[:, sl], wk[:, sl], wv[:, sl], wo[sl, :]
                a_blk.append((wq_h @ wk_h.T) * scale)          # (E, E)  folded Q.K^T
                vo_blk.append(wv_h @ wo_h)                     # (E, E)  folded V.out-proj
                vbias.append((wk_h @ bq[0, sl]) * scale)       # (E,)    surviving key-side score bias
                b_out = b_out + bv[0, sl] @ wo_h               # (E,)    fold bv through out-proj
            return a_blk, vo_blk, jnp.stack(vbias), b_out

        a1, vo1, vb1, bo1f = fold_mha(wq1, bq1, wk1, bk1, wv1, bv1, wo1, bo1)
        a2, vo2, vb2, bo2f = fold_mha(wq2, bq2, wk2, bk2, wv2, bv2, wo2, bo2)

        w1 = jnp.concatenate(a1 + vo1, axis=1)                               # (E, 4E)
        w2kv = jnp.concatenate(
            [jnp.concatenate([vo2[h], vo2[h] @ wf], axis=1) for h in range(H)], axis=1)   # (E, 4E)
        w2a = jnp.concatenate(a2, axis=1)                                    # (E, 2E)
        b_after = bo2f @ wf + bf[0]                                          # (E,) folded ff bias

        z = jnp.zeros((E, FUSED_W), jnp.float32)
        w_big = jnp.concatenate([jnp.concatenate([w1, z], axis=1),
                                 jnp.concatenate([z, w2kv], axis=1)], axis=0)    # (2E, 256)

        b_pack = jnp.concatenate(
            [vb1, bo1f[None, :], vb2, bo2f[None, :], b_after[None, :],
             g1, be1, g2, be2, g3, be3], axis=0)                             # (NB_ROWS, E)

        slab = jnp.zeros((SLAB_ROWS, W_COLS), jnp.float32)
        slab = slab.at[0:2 * E, :].set(w_big)
        slab = slab.at[2 * E:3 * E, 0:H * E].set(w2a)
        slab = slab.at[3 * E:3 * E + NB_ROWS, 0:E].set(b_pack)

    assert slab.shape == (SLAB_ROWS, W_COLS)
    return slab.astype(jnp.float32)


# ------------------------------ pure-JAX reference ------------------------------
def reference_forward(x, enc, params):
    """Original (unfused) math of the torch module, in plain JAX — used only for the check."""
    (wq1, bq1, wk1, bk1, wv1, bv1, wo1, bo1,
     wq2, bq2, wk2, bk2, wv2, bv2, wo2, bo2,
     wf, bf, g1, be1, g2, be2, g3, be3) = params

    def softmax(s):
        m = jnp.max(s, axis=-1, keepdims=True)
        p = jnp.exp(s - m)
        return p / jnp.sum(p, axis=-1, keepdims=True)

    def mha(x_q, x_kv, wq, bq, wk, bk, wv, bv, wo, bo):
        q, k, v = x_q @ wq + bq, x_kv @ wk + bk, x_kv @ wv + bv
        zs = []
        for h in range(H):
            sl = slice(h * DH, (h + 1) * DH)
            s = (q[:, sl] @ k[:, sl].T) / (DH ** 0.5)
            zs.append(softmax(s) @ v[:, sl])
        return jnp.concatenate(zs, axis=1) @ wo + bo          # head concat + output Linear

    def layer_norm(t, gamma, beta):
        return gamma * (t - jnp.mean(t)) / (jnp.std(t, ddof=1) + EPS) + beta

    attn1 = mha(x, x, wq1, bq1, wk1, bk1, wv1, bv1, wo1, bo1)
    x1 = layer_norm(x + attn1, g1, be1)
    attn2 = mha(x1, enc, wq2, bq2, wk2, bk2, wv2, bv2, wo2, bo2)
    x2 = layer_norm(x1 + attn2, g2, be2)
    after = attn2 @ wf + bf
    return layer_norm(x2 + after, g3, be3)


if __name__ == "__main__":
    key = jax.random.PRNGKey(0)
    kx, ke, kp = jax.random.split(key, 3)
    x = jax.random.normal(kx, (S_DEC, E), jnp.float32)
    encoder_hidden = jax.random.normal(ke, (S_ENC, E), jnp.float32)
    params = make_params(kp)

    slab = fold_params(params)                             # one-time host-side fold + pack
    out = decoder_layer(x, encoder_hidden, slab)
    out = jax.block_until_ready(out)

    assert out.shape == (S_DEC, E) and out.dtype == jnp.float32

    # Sanity check against the original unfused math at full precision.  Tolerance covers the
    # approximate EUP reciprocal (softmax), the rsqrt eps-placement in LayerNorm, the MXU pass
    # decomposition, and the exact host-side algebraic refolding of the weights.
    with jax.default_matmul_precision("highest"):
        ref = reference_forward(x, encoder_hidden, params)
    err = float(jnp.max(jnp.abs(out - ref)))
    assert err < 2e-2, f"mismatch vs reference: max abs err = {err}"

    print("KERNEL_OK")
</pallas_src>

<mosaic_0001>
module attributes {stable_mosaic.version = 11 : i64} {
  func.func @_decoder_kernel(%arg0: memref<8x64xf32, #tpu.memory_space<vmem>>, %arg1: memref<109x256xf32, #tpu.memory_space<vmem>>, %arg2: memref<8x32xf32, #tpu.memory_space<vmem>>, %arg3: memref<8x16xf32, #tpu.memory_space<vmem>>, %arg4: memref<8x16xf32, #tpu.memory_space<vmem>>) attributes {dimension_semantics = [], scalar_prefetch = 0 : i64, scratch_operands = 2 : i64, tpu.core_type = #tpu.core_type<tc>} {
    %c0 = arith.constant 0 : index
    %c0_0 = arith.constant 0 : index
    %0 = vector.load %arg0[%c0, %c0_0] : memref<8x64xf32, #tpu.memory_space<vmem>>, vector<8x64xf32>
    %1 = vector.extract_strided_slice %0 {offsets = [0, 0], sizes = [8, 32], strides = [1, 1]} : vector<8x64xf32> to vector<8x32xf32>
    %2 = vector.extract_strided_slice %0 {offsets = [0, 32], sizes = [8, 32], strides = [1, 1]} : vector<8x64xf32> to vector<8x32xf32>
    %c0_1 = arith.constant 0 : index
    %c0_2 = arith.constant 0 : index
    %3 = vector.load %arg1[%c0_1, %c0_2] : memref<109x256xf32, #tpu.memory_space<vmem>>, vector<64x256xf32>
    %c64 = arith.constant 64 : index
    %c0_3 = arith.constant 0 : index
    %4 = vector.load %arg1[%c64, %c0_3] : memref<109x256xf32, #tpu.memory_space<vmem>>, vector<32x64xf32>
    %c96 = arith.constant 96 : index
    %c0_4 = arith.constant 0 : index
    %5 = vector.load %arg1[%c96, %c0_4] : memref<109x256xf32, #tpu.memory_space<vmem>>, vector<13x32xf32>
    %cst = arith.constant dense<0.000000e+00> : vector<8x256xf32>
    %6 = tpu.matmul %0, %3, %cst {dimension_numbers = #tpu.dot_dimension_numbers<[1], [0], [0], [1], [0, 0, 1, 1], [], []>} : vector<8x64xf32>, vector<64x256xf32>, vector<8x256xf32> -> vector<8x256xf32>
    %7 = vector.extract_strided_slice %6 {offsets = [0, 0], sizes = [8, 128], strides = [1, 1]} : vector<8x256xf32> to vector<8x128xf32>
    %8 = vector.extract_strided_slice %6 {offsets = [0, 128], sizes = [8, 128], strides = [1, 1]} : vector<8x256xf32> to vector<8x128xf32>
    %9 = vector.extract_strided_slice %7 {offsets = [0, 0], sizes = [8, 64], strides = [1, 1]} : vector<8x128xf32> to vector<8x64xf32>
    %10 = vector.extract_strided_slice %5 {offsets = [0, 0], sizes = [2, 32], strides = [1, 1]} : vector<13x32xf32> to vector<2x32xf32>
    %11 = vector.extract_strided_slice %9 {offsets = [0, 0], sizes = [8, 32], strides = [1, 1]} : vector<8x64xf32> to vector<8x32xf32>
    %12 = vector.extract_strided_slice %9 {offsets = [0, 32], sizes = [8, 32], strides = [1, 1]} : vector<8x64xf32> to vector<8x32xf32>
    %13 = tpu.concatenate %11, %12, %10 in 0 : vector<8x32xf32>, vector<8x32xf32>, vector<2x32xf32> -> vector<18x32xf32>
    %cst_5 = arith.constant dense<0.000000e+00> : vector<18x8xf32>
    %14 = tpu.matmul %13, %1, %cst_5 {dimension_numbers = #tpu.dot_dimension_numbers<[1], [1], [0], [0], [0, 0, 1, 0], [], []>} : vector<18x32xf32>, vector<8x32xf32>, vector<18x8xf32> -> vector<18x8xf32>
    %15 = vector.extract_strided_slice %14 {offsets = [16, 0], sizes = [1, 8], strides = [1, 1]} : vector<18x8xf32> to vector<1x8xf32>
    %16 = vector.shape_cast %15 : vector<1x8xf32> to vector<1x8xf32>
    %17 = vector.broadcast %16 : vector<1x8xf32> to vector<8x8xf32>
    %18 = vector.extract_strided_slice %14 {offsets = [17, 0], sizes = [1, 8], strides = [1, 1]} : vector<18x8xf32> to vector<1x8xf32>
    %19 = vector.shape_cast %18 : vector<1x8xf32> to vector<1x8xf32>
    %20 = vector.broadcast %19 : vector<1x8xf32> to vector<8x8xf32>
    %21 = tpu.concatenate %17, %20 in 0 : vector<8x8xf32>, vector<8x8xf32> -> vector<16x8xf32>
    %22 = vector.extract_strided_slice %14 {offsets = [0, 0], sizes = [16, 8], strides = [1, 1]} : vector<18x8xf32> to vector<16x8xf32>
    %23 = arith.addf %22, %21 : vector<16x8xf32>
    %cst_6 = arith.constant dense<0xFF800000> : vector<16xf32>
    %24 = vector.multi_reduction <maximumf>, %23, %cst_6 [1] : vector<16x8xf32> to vector<16xf32>
    %25 = vector.shape_cast %24 : vector<16xf32> to vector<16x1xf32>
    %26 = vector.broadcast %25 : vector<16x1xf32> to vector<16x8xf32>
    %27 = arith.subf %23, %26 : vector<16x8xf32>
    %28 = math.exp %27 : vector<16x8xf32>
    %cst_7 = arith.constant dense<0.000000e+00> : vector<16xf32>
    %29 = vector.multi_reduction <add>, %28, %cst_7 [1] : vector<16x8xf32> to vector<16xf32>
    %30 = vector.shape_cast %29 : vector<16xf32> to vector<16x1xf32>
    %31 = tpu.reciprocal %30 {approx = true} : vector<16x1xf32> -> vector<16x1xf32>
    %32 = vector.broadcast %31 : vector<16x1xf32> to vector<16x8xf32>
    %33 = arith.mulf %28, %32 : vector<16x8xf32>
    %34 = vector.extract_strided_slice %33 {offsets = [0, 0], sizes = [8, 8], strides = [1, 1]} : vector<16x8xf32> to vector<8x8xf32>
    %c0_8 = arith.constant 0 : index
    %c0_9 = arith.constant 0 : index
    %35 = vector.load %arg3[%c0_8, %c0_9] : memref<8x16xf32, #tpu.memory_space<vmem>>, vector<8x8xf32>
    tpu.vector_store %arg3[%c0_8, %c0_9], %34 {strides = array<i32>} : memref<8x16xf32, #tpu.memory_space<vmem>>, vector<8x8xf32>,
    %36 = vector.extract_strided_slice %33 {offsets = [8, 0], sizes = [8, 8], strides = [1, 1]} : vector<16x8xf32> to vector<8x8xf32>
    %c0_10 = arith.constant 0 : index
    %c8 = arith.constant 8 : index
    %37 = vector.load %arg3[%c0_10, %c8] : memref<8x16xf32, #tpu.memory_space<vmem>>, vector<8x8xf32>
    tpu.vector_store %arg3[%c0_10, %c8], %36 {strides = array<i32>} : memref<8x16xf32, #tpu.memory_space<vmem>>, vector<8x8xf32>,
    %c0_11 = arith.constant 0 : index
    %c0_12 = arith.constant 0 : index
    %38 = vector.load %arg3[%c0_11, %c0_12] : memref<8x16xf32, #tpu.memory_space<vmem>>, vector<8x16xf32>
    %39 = vector.extract_strided_slice %7 {offsets = [0, 64], sizes = [8, 32], strides = [1, 1]} : vector<8x128xf32> to vector<8x32xf32>
    %40 = vector.extract_strided_slice %7 {offsets = [0, 96], sizes = [8, 32], strides = [1, 1]} : vector<8x128xf32> to vector<8x32xf32>
    %41 = tpu.concatenate %39, %40 in 0 : vector<8x32xf32>, vector<8x32xf32> -> vector<16x32xf32>
    %cst_13 = arith.constant dense<0.000000e+00> : vector<8x32xf32>
    %42 = tpu.matmul %38, %41, %cst_13 {dimension_numbers = #tpu.dot_dimension_numbers<[1], [0], [0], [1], [0, 0, 1, 1], [], []>} : vector<8x16xf32>, vector<16x32xf32>, vector<8x32xf32> -> vector<8x32xf32>
    %43 = vector.extract_strided_slice %5 {offsets = [2, 0], sizes = [1, 32], strides = [1, 1]} : vector<13x32xf32> to vector<1x32xf32>
    %44 = vector.broadcast %43 : vector<1x32xf32> to vector<8x32xf32>
    %45 = arith.addf %42, %44 : vector<8x32xf32>
    %46 = arith.addf %1, %45 : vector<8x32xf32>
    %47 = vector.extract_strided_slice %5 {offsets = [7, 0], sizes = [1, 32], strides = [1, 1]} : vector<13x32xf32> to vector<1x32xf32>
    %48 = vector.extract_strided_slice %5 {offsets = [8, 0], sizes = [1, 32], strides = [1, 1]} : vector<13x32xf32> to vector<1x32xf32>
    %cst_14 = arith.constant dense<0.000000e+00> : vector<8xf32>
    %49 = vector.multi_reduction <add>, %46, %cst_14 [1] : vector<8x32xf32> to vector<8xf32>
    %50 = vector.shape_cast %49 : vector<8xf32> to vector<8x1xf32>
    %cst_15 = arith.constant dense<0.000000e+00> : vector<1xf32>
    %51 = vector.multi_reduction <add>, %50, %cst_15 [0] : vector<8x1xf32> to vector<1xf32>
    %52 = vector.shape_cast %51 : vector<1xf32> to vector<1x1xf32>
    %cst_16 = arith.constant 3.906250e-03 : f32
    %53 = vector.broadcast %cst_16 : f32 to vector<1x1xf32>
    %54 = arith.mulf %52, %53 : vector<1x1xf32>
    %55 = vector.broadcast %54 : vector<1x1xf32> to vector<8x32xf32>
    %56 = arith.subf %46, %55 : vector<8x32xf32>
    %57 = arith.mulf %56, %56 : vector<8x32xf32>
    %cst_17 = arith.constant dense<0.000000e+00> : vector<8xf32>
    %58 = vector.multi_reduction <add>, %57, %cst_17 [1] : vector<8x32xf32> to vector<8xf32>
    %59 = vector.shape_cast %58 : vector<8xf32> to vector<8x1xf32>
    %cst_18 = arith.constant dense<0.000000e+00> : vector<1xf32>
    %60 = vector.multi_reduction <add>, %59, %cst_18 [0] : vector<8x1xf32> to vector<1xf32>
    %61 = vector.shape_cast %60 : vector<1xf32> to vector<1x1xf32>
    %cst_19 = arith.constant 0.00392156886 : f32
    %62 = vector.broadcast %cst_19 : f32 to vector<1x1xf32>
    %63 = arith.mulf %61, %62 : vector<1x1xf32>
    %cst_20 = arith.constant 9.99999996E-13 : f32
    %64 = vector.broadcast %cst_20 : f32 to vector<1x1xf32>
    %65 = arith.addf %63, %64 : vector<1x1xf32>
    %66 = math.rsqrt %65 : vector<1x1xf32>
    %67 = vector.broadcast %66 : vector<1x1xf32> to vector<8x32xf32>
    %68 = arith.mulf %56, %67 : vector<8x32xf32>
    %69 = vector.broadcast %47 : vector<1x32xf32> to vector<8x32xf32>
    %70 = arith.mulf %69, %68 : vector<8x32xf32>
    %71 = vector.broadcast %48 : vector<1x32xf32> to vector<8x32xf32>
    %72 = arith.addf %70, %71 : vector<8x32xf32>
    %cst_21 = arith.constant dense<0.000000e+00> : vector<8x64xf32>
    %73 = tpu.matmul %72, %4, %cst_21 {dimension_numbers = #tpu.dot_dimension_numbers<[1], [0], [0], [1], [0, 0, 1, 1], [], []>} : vector<8x32xf32>, vector<32x64xf32>, vector<8x64xf32> -> vector<8x64xf32>
    %74 = vector.extract_strided_slice %5 {offsets = [3, 0], sizes = [2, 32], strides = [1, 1]} : vector<13x32xf32> to vector<2x32xf32>
    %75 = vector.extract_strided_slice %73 {offsets = [0, 0], sizes = [8, 32], strides = [1, 1]} : vector<8x64xf32> to vector<8x32xf32>
    %76 = vector.extract_strided_slice %73 {offsets = [0, 32], sizes = [8, 32], strides = [1, 1]} : vector<8x64xf32> to vector<8x32xf32>
    %77 = tpu.concatenate %75, %76, %74 in 0 : vector<8x32xf32>, vector<8x32xf32>, vector<2x32xf32> -> vector<18x32xf32>
    %cst_22 = arith.constant dense<0.000000e+00> : vector<18x8xf32>
    %78 = tpu.matmul %77, %2, %cst_22 {dimension_numbers = #tpu.dot_dimension_numbers<[1], [1], [0], [0], [0, 0, 1, 0], [], []>} : vector<18x32xf32>, vector<8x32xf32>, vector<18x8xf32> -> vector<18x8xf32>
    %79 = vector.extract_strided_slice %78 {offsets = [16, 0], sizes = [1, 8], strides = [1, 1]} : vector<18x8xf32> to vector<1x8xf32>
    %80 = vector.shape_cast %79 : vector<1x8xf32> to vector<1x8xf32>
    %81 = vector.broadcast %80 : vector<1x8xf32> to vector<8x8xf32>
    %82 = vector.extract_strided_slice %78 {offsets = [17, 0], sizes = [1, 8], strides = [1, 1]} : vector<18x8xf32> to vector<1x8xf32>
    %83 = vector.shape_cast %82 : vector<1x8xf32> to vector<1x8xf32>
    %84 = vector.broadcast %83 : vector<1x8xf32> to vector<8x8xf32>
    %85 = tpu.concatenate %81, %84 in 0 : vector<8x8xf32>, vector<8x8xf32> -> vector<16x8xf32>
    %86 = vector.extract_strided_slice %78 {offsets = [0, 0], sizes = [16, 8], strides = [1, 1]} : vector<18x8xf32> to vector<16x8xf32>
    %87 = arith.addf %86, %85 : vector<16x8xf32>
    %cst_23 = arith.constant dense<0xFF800000> : vector<16xf32>
    %88 = vector.multi_reduction <maximumf>, %87, %cst_23 [1] : vector<16x8xf32> to vector<16xf32>
    %89 = vector.shape_cast %88 : vector<16xf32> to vector<16x1xf32>
    %90 = vector.broadcast %89 : vector<16x1xf32> to vector<16x8xf32>
    %91 = arith.subf %87, %90 : vector<16x8xf32>
    %92 = math.exp %91 : vector<16x8xf32>
    %cst_24 = arith.constant dense<0.000000e+00> : vector<16xf32>
    %93 = vector.multi_reduction <add>, %92, %cst_24 [1] : vector<16x8xf32> to vector<16xf32>
    %94 = vector.shape_cast %93 : vector<16xf32> to vector<16x1xf32>
    %95 = tpu.reciprocal %94 {approx = true} : vector<16x1xf32> -> vector<16x1xf32>
    %96 = vector.broadcast %95 : vector<16x1xf32> to vector<16x8xf32>
    %97 = arith.mulf %92, %96 : vector<16x8xf32>
    %98 = vector.extract_strided_slice %97 {offsets = [0, 0], sizes = [8, 8], strides = [1, 1]} : vector<16x8xf32> to vector<8x8xf32>
    %c0_25 = arith.constant 0 : index
    %c0_26 = arith.constant 0 : index
    %99 = vector.load %arg4[%c0_25, %c0_26] : memref<8x16xf32, #tpu.memory_space<vmem>>, vector<8x8xf32>
    tpu.vector_store %arg4[%c0_25, %c0_26], %98 {strides = array<i32>} : memref<8x16xf32, #tpu.memory_space<vmem>>, vector<8x8xf32>,
    %100 = vector.extract_strided_slice %97 {offsets = [8, 0], sizes = [8, 8], strides = [1, 1]} : vector<16x8xf32> to vector<8x8xf32>
    %c0_27 = arith.constant 0 : index
    %c8_28 = arith.constant 8 : index
    %101 = vector.load %arg4[%c0_27, %c8_28] : memref<8x16xf32, #tpu.memory_space<vmem>>, vector<8x8xf32>
    tpu.vector_store %arg4[%c0_27, %c8_28], %100 {strides = array<i32>} : memref<8x16xf32, #tpu.memory_space<vmem>>, vector<8x8xf32>,
    %c0_29 = arith.constant 0 : index
    %c0_30 = arith.constant 0 : index
    %102 = vector.load %arg4[%c0_29, %c0_30] : memref<8x16xf32, #tpu.memory_space<vmem>>, vector<8x16xf32>
    %103 = vector.extract_strided_slice %8 {offsets = [0, 0], sizes = [8, 64], strides = [1, 1]} : vector<8x128xf32> to vector<8x64xf32>
    %104 = vector.extract_strided_slice %8 {offsets = [0, 64], sizes = [8, 64], strides = [1, 1]} : vector<8x128xf32> to vector<8x64xf32>
    %105 = tpu.concatenate %103, %104 in 0 : vector<8x64xf32>, vector<8x64xf32> -> vector<16x64xf32>
    %cst_31 = arith.constant dense<0.000000e+00> : vector<8x64xf32>
    %106 = tpu.matmul %102, %105, %cst_31 {dimension_numbers = #tpu.dot_dimension_numbers<[1], [0], [0], [1], [0, 0, 1, 1], [], []>} : vector<8x16xf32>, vector<16x64xf32>, vector<8x64xf32> -> vector<8x64xf32>
    %107 = vector.extract_strided_slice %106 {offsets = [0, 0], sizes = [8, 32], strides = [1, 1]} : vector<8x64xf32> to vector<8x32xf32>
    %108 = vector.extract_strided_slice %5 {offsets = [5, 0], sizes = [1, 32], strides = [1, 1]} : vector<13x32xf32> to vector<1x32xf32>
    %109 = vector.broadcast %108 : vector<1x32xf32> to vector<8x32xf32>
    %110 = arith.addf %107, %109 : vector<8x32xf32>
    %111 = vector.extract_strided_slice %106 {offsets = [0, 32], sizes = [8, 32], strides = [1, 1]} : vector<8x64xf32> to vector<8x32xf32>
    %112 = vector.extract_strided_slice %5 {offsets = [6, 0], sizes = [1, 32], strides = [1, 1]} : vector<13x32xf32> to vector<1x32xf32>
    %113 = vector.broadcast %112 : vector<1x32xf32> to vector<8x32xf32>
    %114 = arith.addf %111, %113 : vector<8x32xf32>
    %115 = arith.addf %72, %110 : vector<8x32xf32>
    %116 = vector.extract_strided_slice %5 {offsets = [9, 0], sizes = [1, 32], strides = [1, 1]} : vector<13x32xf32> to vector<1x32xf32>
    %117 = vector.extract_strided_slice %5 {offsets = [10, 0], sizes = [1, 32], strides = [1, 1]} : vector<13x32xf32> to vector<1x32xf32>
    %cst_32 = arith.constant dense<0.000000e+00> : vector<8xf32>
    %118 = vector.multi_reduction <add>, %115, %cst_32 [1] : vector<8x32xf32> to vector<8xf32>
    %119 = vector.shape_cast %118 : vector<8xf32> to vector<8x1xf32>
    %cst_33 = arith.constant dense<0.000000e+00> : vector<1xf32>
    %120 = vector.multi_reduction <add>, %119, %cst_33 [0] : vector<8x1xf32> to vector<1xf32>
    %121 = vector.shape_cast %120 : vector<1xf32> to vector<1x1xf32>
    %cst_34 = arith.constant 3.906250e-03 : f32
    %122 = vector.broadcast %cst_34 : f32 to vector<1x1xf32>
    %123 = arith.mulf %121, %122 : vector<1x1xf32>
    %124 = vector.broadcast %123 : vector<1x1xf32> to vector<8x32xf32>
    %125 = arith.subf %115, %124 : vector<8x32xf32>
    %126 = arith.mulf %125, %125 : vector<8x32xf32>
    %cst_35 = arith.constant dense<0.000000e+00> : vector<8xf32>
    %127 = vector.multi_reduction <add>, %126, %cst_35 [1] : vector<8x32xf32> to vector<8xf32>
    %128 = vector.shape_cast %127 : vector<8xf32> to vector<8x1xf32>
    %cst_36 = arith.constant dense<0.000000e+00> : vector<1xf32>
    %129 = vector.multi_reduction <add>, %128, %cst_36 [0] : vector<8x1xf32> to vector<1xf32>
    %130 = vector.shape_cast %129 : vector<1xf32> to vector<1x1xf32>
    %cst_37 = arith.constant 0.00392156886 : f32
    %131 = vector.broadcast %cst_37 : f32 to vector<1x1xf32>
    %132 = arith.mulf %130, %131 : vector<1x1xf32>
    %cst_38 = arith.constant 9.99999996E-13 : f32
    %133 = vector.broadcast %cst_38 : f32 to vector<1x1xf32>
    %134 = arith.addf %132, %133 : vector<1x1xf32>
    %135 = math.rsqrt %134 : vector<1x1xf32>
    %136 = vector.broadcast %135 : vector<1x1xf32> to vector<8x32xf32>
    %137 = arith.mulf %125, %136 : vector<8x32xf32>
    %138 = vector.broadcast %116 : vector<1x32xf32> to vector<8x32xf32>
    %139 = arith.mulf %138, %137 : vector<8x32xf32>
    %140 = vector.broadcast %117 : vector<1x32xf32> to vector<8x32xf32>
    %141 = arith.addf %139, %140 : vector<8x32xf32>
    %142 = arith.addf %141, %114 : vector<8x32xf32>
    %143 = vector.extract_strided_slice %5 {offsets = [11, 0], sizes = [1, 32], strides = [1, 1]} : vector<13x32xf32> to vector<1x32xf32>
    %144 = vector.extract_strided_slice %5 {offsets = [12, 0], sizes = [1, 32], strides = [1, 1]} : vector<13x32xf32> to vector<1x32xf32>
    %cst_39 = arith.constant dense<0.000000e+00> : vector<8xf32>
    %145 = vector.multi_reduction <add>, %142, %cst_39 [1] : vector<8x32xf32> to vector<8xf32>
    %146 = vector.shape_cast %145 : vector<8xf32> to vector<8x1xf32>
    %cst_40 = arith.constant dense<0.000000e+00> : vector<1xf32>
    %147 = vector.multi_reduction <add>, %146, %cst_40 [0] : vector<8x1xf32> to vector<1xf32>
    %148 = vector.shape_cast %147 : vector<1xf32> to vector<1x1xf32>
    %cst_41 = arith.constant 3.906250e-03 : f32
    %149 = vector.broadcast %cst_41 : f32 to vector<1x1xf32>
    %150 = arith.mulf %148, %149 : vector<1x1xf32>
    %151 = vector.broadcast %150 : vector<1x1xf32> to vector<8x32xf32>
    %152 = arith.subf %142, %151 : vector<8x32xf32>
    %153 = arith.mulf %152, %152 : vector<8x32xf32>
    %cst_42 = arith.constant dense<0.000000e+00> : vector<8xf32>
    %154 = vector.multi_reduction <add>, %153, %cst_42 [1] : vector<8x32xf32> to vector<8xf32>
    %155 = vector.shape_cast %154 : vector<8xf32> to vector<8x1xf32>
    %cst_43 = arith.constant dense<0.000000e+00> : vector<1xf32>
    %156 = vector.multi_reduction <add>, %155, %cst_43 [0] : vector<8x1xf32> to vector<1xf32>
    %157 = vector.shape_cast %156 : vector<1xf32> to vector<1x1xf32>
    %cst_44 = arith.constant 0.00392156886 : f32
    %158 = vector.broadcast %cst_44 : f32 to vector<1x1xf32>
    %159 = arith.mulf %157, %158 : vector<1x1xf32>
    %cst_45 = arith.constant 9.99999996E-13 : f32
    %160 = vector.broadcast %cst_45 : f32 to vector<1x1xf32>
    %161 = arith.addf %159, %160 : vector<1x1xf32>
    %162 = math.rsqrt %161 : vector<1x1xf32>
    %163 = vector.broadcast %162 : vector<1x1xf32> to vector<8x32xf32>
    %164 = arith.mulf %152, %163 : vector<8x32xf32>
    %165 = vector.broadcast %143 : vector<1x32xf32> to vector<8x32xf32>
    %166 = arith.mulf %165, %164 : vector<8x32xf32>
    %167 = vector.broadcast %144 : vector<1x32xf32> to vector<8x32xf32>
    %168 = arith.addf %166, %167 : vector<8x32xf32>
    %c0_46 = arith.constant 0 : index
    %c0_47 = arith.constant 0 : index
    %169 = vector.load %arg2[%c0_46, %c0_47] : memref<8x32xf32, #tpu.memory_space<vmem>>, vector<8x32xf32>
    tpu.vector_store %arg2[%c0_46, %c0_47], %168 {strides = array<i32>} : memref<8x32xf32, #tpu.memory_space<vmem>>, vector<8x32xf32>,
    return
  }
}

</mosaic_0001>

<llo_original>
// kernel: decoder_layer.1
$region0: #{decoder_layer.1}
  #allocation0 [shape = 'u32[]', space=smem, size = 0x4, offset = 0x4, fixed_abs, tag = 'smem constant byte address 0x4 - core index']
  #allocation1 [shape = 'u32[72,128]{1,0:T(1,128)}', space=vmem, size = 0x9000, scoped, tag = 'internal scratch']
  #allocation2 [shape = 'f32[8,16]{1,0:T(8,128)}', space=vmem, size = 0x1000, scoped, tag = 'scratch operand']
  #allocation3 [shape = 'f32[8,16]{1,0:T(8,128)}', space=vmem, size = 0x1000, scoped, tag = 'scratch operand']
  %s0 = inlined_call_operand.vmem [shape: f32[8,64], index: 0, kind: input, shape index: {}]
  %s1 = inlined_call_operand.hbm [shape: f32[109,256], index: 1, kind: input, shape index: {}]
  %s2 = inlined_call_operand.hbm [shape: f32[8,32], index: 2, kind: output, shape index: {}]
  %s3 = sld [smem:[#allocation0]]
  $region22: #{decoder_layer.1} parent=0
    _
  %s5 = ssub.s32 1, %s3
  %s6 = scalar_select 0, %s5, %s3
  $region1: #{decoder_layer.1} parent=0
    #allocation4 [shape = 'u8[114688]{0}', space=vmem, size = 0x1c000, scoped, tag = 'input window, operand 1, single buffered']
    #allocation5 [shape = 's32[1]{0}', space=sflag, size = 0x4, scoped, tag = 'scoped memory for decoder_layer.1']
    #allocation6 [shape = 's32[1]{0}', space=sflag, size = 0x4, scoped, tag = 'scoped memory for decoder_layer.1']
    #allocation7 [shape = 'u8[4096]{0}', space=vmem, size = 0x1000, scoped, tag = 'output window, operand 0, single buffered']
    %7 = vsyncpa [#allocation5], 0
    %8 = vsyncpa [#allocation6], 0
    // Predicated region
    $region2: #{decoder_layer.1} parent=1 // pred_check
      _
    $region3: #{decoder_layer.1} parent=1 // pred_check_branch
      %10 = sbr.rel (0) target = $region5
    $region4: #{decoder_layer.1} parent=1 // pred_region
      _
    $region5: #{decoder_layer.1} parent=1 // pred_fallthru
      _
    // Predicated region
    $region6: #{decoder_layer.1} parent=1 // pred_check
      _
    $region7: #{decoder_layer.1} parent=1 // pred_check_branch
      %12 = sbr.rel (0) target = $region9
    $region8: #{decoder_layer.1} parent=1 // pred_region
      %14 = vsyncadd [#allocation5], 0
      %s15 = sshll.u32 %s1, 4
      %s16 = int_to_ptr.hbm [resolvable:$true] %s15
      %s17 = sshll.u32 [#allocation4], 4
      %s18 = int_to_ptr.vmem [resolvable:$true] %s17
      %23 = dma.hbm_to_vmem [thread:$0]  %s16, 3584, %s18, [#allocation5], 256, 256, 16
    $region9: #{decoder_layer.1} parent=1 // pred_fallthru
      _
    // Predicated region
    $region10: #{decoder_layer.1} parent=1 // pred_check
      _
    $region11: #{decoder_layer.1} parent=1 // pred_check_branch
      %25 = sbr.rel (0) target = $region13
    $region12: #{decoder_layer.1} parent=1 // pred_region
      %27 = dma.done [#allocation5], 3584
    $region13: #{decoder_layer.1} parent=1 // pred_fallthru
      _
    %v28 = vld [vmem:[%s0] sm:$0xff]
    %v29 = vld [vmem:[#allocation4] sm:$0xff]
    %v30 = vld [vmem:[#allocation4 + $0x8] sm:$0xff]
    %v31 = vld [vmem:[#allocation4 + $0x10] sm:$0xff]
    %v32 = vld [vmem:[#allocation4 + $0x18] sm:$0xff]
    %v33 = vld [vmem:[#allocation4 + $0x20] sm:$0xff]
    %v34 = vld [vmem:[#allocation4 + $0x28] sm:$0xff]
    %v35 = vld [vmem:[#allocation4 + $0x30] sm:$0xff]
    %v36 = vld [vmem:[#allocation4 + $0x38] sm:$0xff]
    %v37 = vld [vmem:[#allocation4 + $0x40] sm:$0xff]
    %v38 = vld [vmem:[#allocation4 + $0x48] sm:$0xff]
    %v39 = vld [vmem:[#allocation4 + $0x50] sm:$0xff]
    %v40 = vld [vmem:[#allocation4 + $0x58] sm:$0xff]
    %v41 = vld [vmem:[#allocation4 + $0x60] sm:$0xff]
    %v42 = vld [vmem:[#allocation4 + $0x68] sm:$0xff]
    %v43 = vld [vmem:[#allocation4 + $0x70] sm:$0xff]
    %v44 = vld [vmem:[#allocation4 + $0x78] sm:$0xff]
    %v45 = vld [vmem:[#allocation4 + $0x80] sm:$0xff]
    %v46 = vld [vmem:[#allocation4 + $0x90] sm:$0xff]
    %v47 = vld [vmem:[#allocation4 + $0xa0] sm:$0xff]
    %v48 = vld [vmem:[#allocation4 + $0xb0] sm:$0xff]
    %v49 = vld [vmem:[#allocation4 + $0xc0] sm:$0xff]
    %v50 = vld [vmem:[#allocation4 + $0xd0] sm:$0x1f]
    %vm51 = vcmask 523264
    %v53 = vsel %vm51, %v28, 0
    %55 = vmatpush.msra.mxu0 0.0
    %56 = vmatpush.msra.mxu0 0.0
    %57 = vmatpush.msra.mxu0 0.0
    %58 = vmatpush.msra.mxu0 0.0
    %59 = vmatpush.msra.mxu0 0.0
    %60 = vmatpush.msra.mxu0 0.0
    %61 = vmatpush.msra.mxu0 0.0
    %62 = vmatpush.msra.mxu0 0.0
    %63 = vmatpush.msra.mxu0 %v43
    %64 = vmatpush.msra.mxu0 %v41
    %65 = vmatpush.msra.mxu0 %v39
    %66 = vmatpush.msra.mxu0 %v37
    %67 = vmatpush.msra.mxu0 %v35
    %68 = vmatpush.msra.mxu0 %v33
    %69 = vmatpush.msra.mxu0 %v31
    %70 = vmatpush.msra.mxu0 %v29
    %71 = vmatmul.f32.gmra.mxu0 %v53
    %v72 = vpop.f32.mrf.mxu0
    %v73 = vadd.f32 0.0, %v72
    %74 = vdwg.mxu0
    %75 = vmatpush.msra.mxu0 0.0
    %76 = vmatpush.msra.mxu0 0.0
    %77 = vmatpush.msra.mxu0 0.0
    %78 = vmatpush.msra.mxu0 0.0
    %79 = vmatpush.msra.mxu0 0.0
    %80 = vmatpush.msra.mxu0 0.0
    %81 = vmatpush.msra.mxu0 0.0
    %82 = vmatpush.msra.mxu0 0.0
    %83 = vmatpush.msra.mxu0 %v44
    %84 = vmatpush.msra.mxu0 %v42
    %85 = vmatpush.msra.mxu0 %v40
    %86 = vmatpush.msra.mxu0 %v38
    %87 = vmatpush.msra.mxu0 %v36
    %88 = vmatpush.msra.mxu0 %v34
    %89 = vmatpush.msra.mxu0 %v32
    %90 = vmatpush.msra.mxu0 %v30
    %91 = vmatmul.f32.gmra.mxu0 %v53
    %v92 = vpop.f32.mrf.mxu0
    %v93 = vadd.f32 0.0, %v92
    %94 = vdwg.mxu0
    %96 = vrot.lane.b32.xlu0 %v73, 96
    %v97 = vpop.permute.xlu0 %96
    %vm98 = vcmask 261120
    %v99 = vsel %vm98, %v73, 0
    %v101 = vsel %vm98, %v97, 0
    %v104 = vsel %vm98, %v49, 0
    %v106 = vsel %vm98, %v28, 0
    %108 = vmatpush.xpose.msra.mxu0 0.0
    %109 = vmatpush.xpose.msra.mxu0 0.0
    %110 = vmatpush.xpose.msra.mxu0 0.0
    %111 = vmatpush.xpose.msra.mxu0 0.0
    %112 = vmatpush.xpose.msra.mxu0 0.0
    %113 = vmatpush.xpose.msra.mxu0 0.0
    %114 = vmatpush.xpose.msra.mxu0 0.0
    %115 = vmatpush.xpose.msra.mxu0 0.0
    %116 = vmatpush.xpose.msra.mxu0 0.0
    %117 = vmatpush.xpose.msra.mxu0 0.0
    %118 = vmatpush.xpose.msra.mxu0 0.0
    %119 = vmatpush.xpose.msra.mxu0 0.0
    %120 = vmatpush.xpose.msra.mxu0 0.0
    %121 = vmatpush.xpose.msra.mxu0 0.0
    %122 = vmatpush.xpose.msra.mxu0 0.0
    %123 = vmatpush.xpose.msra.mxu0 %v106
    %124 = vmatmul.f32.gmra.mxu0 %v99
    %v125 = vpop.f32.mrf.mxu0
    %v126 = vadd.f32 0.0, %v125
    %127 = vmatmul.f32.gmra.mxu0 %v101
    %v128 = vpop.f32.mrf.mxu0
    %v129 = vadd.f32 0.0, %v128
    %130 = vmatmul.f32.gmra.mxu0 %v104
    %v131 = vpop.f32.mrf.mxu0
    %v132 = vadd.f32 0.0, %v131
    %133 = vdwg.mxu0
    %v134 = vperm.slane %v132, 0
    %v135 = vperm.slane %v132, 1
    %v136 = vadd.f32 %v126, %v134
    %v137 = vadd.f32 %v129, %v135
    %vm138 = vcmask 64512
    %v139 = vsel %vm138, %v136, -inf
    %140 = vmax.xlane.f32.xlu0 %v139
    %v141 = vpop.xlane.xlu0 %140
    %v142 = vsel %vm138, %v137, -inf
    %143 = vmax.xlane.f32.xlu0 %v142
    %v144 = vpop.xlane.xlu0 %143
    %v145 = vsub.f32 %v136, %v141
    %v146 = vsub.f32 %v137, %v144
    %v147 = vmul.f32 %v145, 1.442695
    %v148 = vpow.pop %v147
    %v149 = vmul.f32 %v146, 1.442695
    %v150 = vpow.pop %v149
    %v151 = vsel %vm138, %v148, 0.0
    %152 = vadd.xlane.f32.xlu0 %v151
    %v153 = vpop.xlane.xlu0 %152
    %v154 = vsel %vm138, %v150, 0.0
    %155 = vadd.xlane.f32.xlu0 %v154
    %v156 = vpop.xlane.xlu0 %155
    %v157 = vrcp.pop %v153
    %v158 = vrcp.pop %v156
    %v159 = vmul.f32 %v148, %v157
    %v160 = vmul.f32 %v150, %v158
    %161 = vst.msk [vmem:[#allocation2] sm:$0xff] %vm138, %v159
    %163 = vrot.lane.b32.xlu0 %v160, 8
    %v164 = vpop.permute.xlu0 %163
    %vm166 = vcmask 130112
    %167 = vst.msk [vmem:[#allocation2] sm:$0xff] %vm166, %v164
    %v168 = vld [vmem:[#allocation2] sm:$0xff]
    %v169 = vperm.slane %v49, 2
    %170 = vrot.lane.b32.xlu0 %v73, 64
    %v171 = vpop.permute.xlu0 %170
    %172 = vrot.lane.b32.xlu0 %v97, 64
    %v173 = vpop.permute.xlu0 %172
    %vm176 = vcmask 130048
    %v178 = vsel %vm176, %v168, 0
    %180 = vmatpush.msra.mxu0 0.0
    %181 = vmatpush.msra.mxu0 0.0
    %182 = vmatpush.msra.mxu0 0.0
    %183 = vmatpush.msra.mxu0 0.0
    %184 = vmatpush.msra.mxu0 0.0
    %185 = vmatpush.msra.mxu0 0.0
    %186 = vmatpush.msra.mxu0 0.0
    %187 = vmatpush.msra.mxu0 0.0
    %188 = vmatpush.msra.mxu0 0.0
    %189 = vmatpush.msra.mxu0 0.0
    %190 = vmatpush.msra.mxu0 0.0
    %191 = vmatpush.msra.mxu0 0.0
    %192 = vmatpush.msra.mxu0 0.0
    %193 = vmatpush.msra.mxu0 0.0
    %194 = vmatpush.msra.mxu0 %v173
    %195 = vmatpush.msra.mxu0 %v171
    %196 = vmatmul.f32.gmra.mxu0 %v178
    %v197 = vpop.f32.mrf.mxu0
    %v198 = vadd.f32 %v169, %v197
    %199 = vdwg.mxu0
    %v200 = vadd.f32 %v28, %v198
    %v201 = vsel %vm98, %v200, 0.0
    %202 = vadd.xlane.f32.xlu0 %v201
    %v203 = vpop.xlane.xlu0 %202
    %v204 = vrot.slane %v203, 4
    %v205 = vadd.f32 %v203, %v204
    %v206 = vrot.slane %v205, 2
    %v207 = vadd.f32 %v205, %v206
    %v208 = vrot.slane %v207, 1
    %v209 = vadd.f32 %v207, %v208
    %v210 = vmul.f32 %v209, 0.00390625
    %v211 = vsub.f32 %v200, %v210
    %v212 = vmul.f32 %v211, %v211
    %v213 = vsel %vm98, %v212, 0.0
    %214 = vadd.xlane.f32.xlu0 %v213
    %v215 = vpop.xlane.xlu0 %214
    %v216 = vrot.slane %v215, 4
    %v217 = vadd.f32 %v215, %v216
    %v218 = vrot.slane %v217, 2
    %v219 = vadd.f32 %v217, %v218
    %v220 = vrot.slane %v219, 1
    %v221 = vadd.f32 %v219, %v220
    %v222 = vmul.f32 %v221, 0.003921569
    %v223 = vadd.f32 %v222, 1e-12
    %v224 = vrsqrt.pop %v223
    %v225 = vmul.f32 %v224, %v223
    %v226 = vmul.f32 %v225, %v224
    %v227 = vmul.f32 0.5, %v226
    %v228 = vsub.f32 1.5, %v227
    %v229 = vmul.f32 %v224, %v228
    %vm230 = vweird.f32 %v223
    %vm231 = vweird.f32 %v224
    %vm232 = vmor %vm230, %vm231
    %v233 = vsel %vm232, %v224, %v229
    %v234 = vmul.f32 %v211, %v233
    %v235 = vperm.slane %v49, 7
    %v236 = vmul.f32 %v235, %v234
    %v237 = vperm.slane %v50, 0
    %v238 = vadd.f32 %v236, %v237
    %v240 = vsel %vm98, %v238, 0
    %242 = vmatpush.msra.mxu0 0.0
    %243 = vmatpush.msra.mxu0 0.0
    %244 = vmatpush.msra.mxu0 0.0
    %245 = vmatpush.msra.mxu0 0.0
    %246 = vmatpush.msra.mxu0 0.0
    %247 = vmatpush.msra.mxu0 0.0
    %248 = vmatpush.msra.mxu0 0.0
    %249 = vmatpush.msra.mxu0 0.0
    %250 = vmatpush.msra.mxu0 0.0
    %251 = vmatpush.msra.mxu0 0.0
    %252 = vmatpush.msra.mxu0 0.0
    %253 = vmatpush.msra.mxu0 0.0
    %254 = vmatpush.msra.mxu0 %v48
    %255 = vmatpush.msra.mxu0 %v47
    %256 = vmatpush.msra.mxu0 %v46
    %257 = vmatpush.msra.mxu0 %v45
    %258 = vmatmul.f32.gmra.mxu0 %v240
    %v259 = vpop.f32.mrf.mxu0
    %v260 = vadd.f32 0.0, %v259
    %261 = vdwg.mxu0
    %263 = vrot.lane.b32.xlu0 %v260, 96
    %v264 = vpop.permute.xlu0 %263
    %v265 = vrot.slane %v49, 3
    %266 = vrot.lane.b32.xlu0 %v28, 96
    %v267 = vpop.permute.xlu0 %266
    %v268 = vsel %vm98, %v260, 0
    %v270 = vsel %vm98, %v264, 0
    %v272 = vsel %vm98, %v265, 0
    %v274 = vsel %vm98, %v267, 0
    %276 = vmatpush.xpose.msra.mxu0 0.0
    %277 = vmatpush.xpose.msra.mxu0 0.0
    %278 = vmatpush.xpose.msra.mxu0 0.0
    %279 = vmatpush.xpose.msra.mxu0 0.0
    %280 = vmatpush.xpose.msra.mxu0 0.0
    %281 = vmatpush.xpose.msra.mxu0 0.0
    %282 = vmatpush.xpose.msra.mxu0 0.0
    %283 = vmatpush.xpose.msra.mxu0 0.0
    %284 = vmatpush.xpose.msra.mxu0 0.0
    %285 = vmatpush.xpose.msra.mxu0 0.0
    %286 = vmatpush.xpose.msra.mxu0 0.0
    %287 = vmatpush.xpose.msra.mxu0 0.0
    %288 = vmatpush.xpose.msra.mxu0 0.0
    %289 = vmatpush.xpose.msra.mxu0 0.0
    %290 = vmatpush.xpose.msra.mxu0 0.0
    %291 = vmatpush.xpose.msra.mxu0 %v274
    %292 = vmatmul.f32.gmra.mxu0 %v268
    %v293 = vpop.f32.mrf.mxu0
    %v294 = vadd.f32 0.0, %v293
    %295 = vmatmul.f32.gmra.mxu0 %v270
    %v296 = vpop.f32.mrf.mxu0
    %v297 = vadd.f32 0.0, %v296
    %298 = vmatmul.f32.gmra.mxu0 %v272
    %v299 = vpop.f32.mrf.mxu0
    %v300 = vadd.f32 0.0, %v299
    %301 = vdwg.mxu0
    %v302 = vperm.slane %v300, 0
    %v303 = vperm.slane %v300, 1
    %v304 = vadd.f32 %v294, %v302
    %v305 = vadd.f32 %v297, %v303
    %v306 = vsel %vm138, %v304, -inf
    %307 = vmax.xlane.f32.xlu0 %v306
    %v308 = vpop.xlane.xlu0 %307
    %v309 = vsel %vm138, %v305, -inf
    %310 = vmax.xlane.f32.xlu0 %v309
    %v311 = vpop.xlane.xlu0 %310
    %v312 = vsub.f32 %v304, %v308
    %v313 = vsub.f32 %v305, %v311
    %v314 = vmul.f32 %v312, 1.442695
    %v315 = vpow.pop %v314
    %v316 = vmul.f32 %v313, 1.442695
    %v317 = vpow.pop %v316
    %v318 = vsel %vm138, %v315, 0.0
    %319 = vadd.xlane.f32.xlu0 %v318
    %v320 = vpop.xlane.xlu0 %319
    %v321 = vsel %vm138, %v317, 0.0
    %322 = vadd.xlane.f32.xlu0 %v321
    %v323 = vpop.xlane.xlu0 %322
    %v324 = vrcp.pop %v320
    %v325 = vrcp.pop %v323
    %v326 = vmul.f32 %v315, %v324
    %v327 = vmul.f32 %v317, %v325
    %328 = vst.msk [vmem:[#allocation3] sm:$0xff] %vm138, %v326
    %330 = vrot.lane.b32.xlu0 %v327, 8
    %v331 = vpop.permute.xlu0 %330
    %333 = vst.msk [vmem:[#allocation3] sm:$0xff] %vm166, %v331
    %v334 = vld [vmem:[#allocation3] sm:$0xff]
    %336 = vrot.lane.b32.xlu0 %v93, 64
    %v337 = vpop.permute.xlu0 %336
    %v340 = vsel %vm176, %v334, 0
    %342 = vmatpush.msra.mxu0 0.0
    %343 = vmatpush.msra.mxu0 0.0
    %344 = vmatpush.msra.mxu0 0.0
    %345 = vmatpush.msra.mxu0 0.0
    %346 = vmatpush.msra.mxu0 0.0
    %347 = vmatpush.msra.mxu0 0.0
    %348 = vmatpush.msra.mxu0 0.0
    %349 = vmatpush.msra.mxu0 0.0
    %350 = vmatpush.msra.mxu0 0.0
    %351 = vmatpush.msra.mxu0 0.0
    %352 = vmatpush.msra.mxu0 0.0
    %353 = vmatpush.msra.mxu0 0.0
    %354 = vmatpush.msra.mxu0 0.0
    %355 = vmatpush.msra.mxu0 0.0
    %356 = vmatpush.msra.mxu0 %v337
    %357 = vmatpush.msra.mxu0 %v93
    %358 = vmatmul.f32.gmra.mxu0 %v340
    %v359 = vpop.f32.mrf.mxu0
    %v360 = vadd.f32 0.0, %v359
    %361 = vdwg.mxu0
    %v362 = vperm.slane %v49, 5
    %v363 = vadd.f32 %v360, %v362
    %v364 = vperm.slane %v49, 6
    %366 = vrot.lane.b32.xlu0 %v364, 32
    %v367 = vpop.permute.xlu0 %366
    %v369 = vadd.f32 %v360, %v367
    %v370 = vadd.f32 %v238, %v363
    %v371 = vsel %vm98, %v370, 0.0
    %372 = vadd.xlane.f32.xlu0 %v371
    %v373 = vpop.xlane.xlu0 %372
    %v374 = vrot.slane %v373, 4
    %v375 = vadd.f32 %v373, %v374
    %v376 = vrot.slane %v375, 2
    %v377 = vadd.f32 %v375, %v376
    %v378 = vrot.slane %v377, 1
    %v379 = vadd.f32 %v377, %v378
    %v380 = vmul.f32 %v379, 0.00390625
    %v381 = vsub.f32 %v370, %v380
    %v382 = vmul.f32 %v381, %v381
    %v383 = vsel %vm98, %v382, 0.0
    %384 = vadd.xlane.f32.xlu0 %v383
    %v385 = vpop.xlane.xlu0 %384
    %v386 = vrot.slane %v385, 4
    %v387 = vadd.f32 %v385, %v386
    %v388 = vrot.slane %v387, 2
    %v389 = vadd.f32 %v387, %v388
    %v390 = vrot.slane %v389, 1
    %v391 = vadd.f32 %v389, %v390
    %v392 = vmul.f32 %v391, 0.003921569
    %v393 = vadd.f32 %v392, 1e-12
    %v394 = vrsqrt.pop %v393
    %v395 = vmul.f32 %v394, %v393
    %v396 = vmul.f32 %v395, %v394
    %v397 = vmul.f32 0.5, %v396
    %v398 = vsub.f32 1.5, %v397
    %v399 = vmul.f32 %v394, %v398
    %vm400 = vweird.f32 %v393
    %vm401 = vweird.f32 %v394
    %vm402 = vmor %vm400, %vm401
    %v403 = vsel %vm402, %v394, %v399
    %v404 = vmul.f32 %v381, %v403
    %v405 = vperm.slane %v50, 1
    %v406 = vmul.f32 %v405, %v404
    %v407 = vperm.slane %v50, 2
    %v408 = vadd.f32 %v406, %v407
    %410 = vrot.lane.b32.xlu0 %v369, 96
    %v411 = vpop.permute.xlu0 %410
    %v413 = vadd.f32 %v408, %v411
    %v414 = vsel %vm98, %v413, 0.0
    %415 = vadd.xlane.f32.xlu0 %v414
    %v416 = vpop.xlane.xlu0 %415
    %v417 = vrot.slane %v416, 4
    %v418 = vadd.f32 %v416, %v417
    %v419 = vrot.slane %v418, 2
    %v420 = vadd.f32 %v418, %v419
    %v421 = vrot.slane %v420, 1
    %v422 = vadd.f32 %v420, %v421
    %v423 = vmul.f32 %v422, 0.00390625
    %v424 = vsub.f32 %v413, %v423
    %v425 = vmul.f32 %v424, %v424
    %v426 = vsel %vm98, %v425, 0.0
    %427 = vadd.xlane.f32.xlu0 %v426
    %v428 = vpop.xlane.xlu0 %427
    %v429 = vrot.slane %v428, 4
    %v430 = vadd.f32 %v428, %v429
    %v431 = vrot.slane %v430, 2
    %v432 = vadd.f32 %v430, %v431
    %v433 = vrot.slane %v432, 1
    %v434 = vadd.f32 %v432, %v433
    %v435 = vmul.f32 %v434, 0.003921569
    %v436 = vadd.f32 %v435, 1e-12
    %v437 = vrsqrt.pop %v436
    %v438 = vmul.f32 %v437, %v436
    %v439 = vmul.f32 %v438, %v437
    %v440 = vmul.f32 0.5, %v439
    %v441 = vsub.f32 1.5, %v440
    %v442 = vmul.f32 %v437, %v441
    %vm443 = vweird.f32 %v436
    %vm444 = vweird.f32 %v437
    %vm445 = vmor %vm443, %vm444
    %v446 = vsel %vm445, %v437, %v442
    %v447 = vmul.f32 %v424, %v446
    %v448 = vperm.slane %v50, 3
    %v449 = vmul.f32 %v448, %v447
    %v450 = vperm.slane %v50, 4
    %v451 = vadd.f32 %v449, %v450
    %452 = vst.msk [vmem:[#allocation7] sm:$0xff] %vm98, %v451
    // Predicated region
    $region14: #{decoder_layer.1} parent=1 // pred_check
      _
    $region15: #{decoder_layer.1} parent=1 // pred_check_branch
      %454 = sbr.rel (0) target = $region17
    $region16: #{decoder_layer.1} parent=1 // pred_region
      %456 = vsyncadd [#allocation6], 0
      %s458 = sshll.u32 [#allocation7], 4
      %s459 = int_to_ptr.vmem [resolvable:$true] %s458
      %s460 = sshll.u32 %s2, 4
      %s461 = int_to_ptr.hbm [resolvable:$true] %s460
      %463 = dma.vmem_to_hbm [thread:$0]  %s459, 128, %s461, [#allocation6]
    $region17: #{decoder_layer.1} parent=1 // pred_fallthru
      _
    // Predicated region
    $region18: #{decoder_layer.1} parent=1 // pred_check
      _
    $region19: #{decoder_layer.1} parent=1 // pred_check_branch
      %465 = sbr.rel (0) target = $region21
    $region20: #{decoder_layer.1} parent=1 // pred_region
      %467 = dma.done [#allocation6], 128
    $region21: #{decoder_layer.1} parent=1 // pred_fallthru
      _
    %468 = vsyncpa [#allocation5], 1
    %469 = vsyncpa [#allocation6], 1

</llo_original>
